<compile_context>
chip_gen: v6e
topology: v6e:2x2x1
jax: 0.10.0
libtpu: 0.0.40
codegen_flags: <defaults>
</compile_context>

<pallas_src>
import functools

import jax
import jax.numpy as jnp
from jax.experimental import pallas as pl
from jax.experimental.pallas import tpu as pltpu

_LANE = 128
_MAX_TM = 1024                     # >512 rows gives diminishing roofline returns
_VMEM_BUDGET = 32 * 1024 * 1024    # per-step working-set target (fits all gens)
_VMEM_LIMIT = 48 * 1024 * 1024     # scoped VMEM limit handed to Mosaic


# ---------------------------------------------------------------------------
# Small helpers
# ---------------------------------------------------------------------------
def _round_up(x, m):
    return ((x + m - 1) // m) * m


def _cdiv(a, b):
    return (a + b - 1) // b


def _pick_tile(padded_dim, cap):
    """Largest multiple of 128 that divides `padded_dim` and is <= cap."""
    best = _LANE
    t = _LANE
    while t <= min(cap, padded_dim):
        if padded_dim % t == 0:
            best = t
        t += _LANE
    return best


def _block_spec(shape, index_map, single_buffered=False):
    """BlockSpec, optionally single-buffered for grid-invariant operands
    (saves VMEM).  Falls back to default buffering if unsupported."""
    if single_buffered:
        try:
            return pl.BlockSpec(shape, index_map, pipeline_mode=pl.Buffered(1))
        except (TypeError, ValueError, AttributeError):
            pass
    return pl.BlockSpec(shape, index_map)


# ---------------------------------------------------------------------------
# Pallas kernels: one (tm, tn) output tile, accumulated over the K grid axis
# ---------------------------------------------------------------------------
def _linear_bias_kernel(x_ref, w_ref, b_ref, o_ref, acc_ref):
    k = pl.program_id(2)

    @pl.when(k == 0)
    def _():
        acc_ref[...] = jnp.zeros_like(acc_ref)

    acc_ref[...] += jnp.dot(x_ref[...], w_ref[...],
                            preferred_element_type=jnp.float32)

    @pl.when(k == pl.num_programs(2) - 1)
    def _():
        o_ref[...] = (acc_ref[...] + b_ref[...]).astype(o_ref.dtype)


def _linear_nobias_kernel(x_ref, w_ref, o_ref, acc_ref):
    k = pl.program_id(2)

    @pl.when(k == 0)
    def _():
        acc_ref[...] = jnp.zeros_like(acc_ref)

    acc_ref[...] += jnp.dot(x_ref[...], w_ref[...],
                            preferred_element_type=jnp.float32)

    @pl.when(k == pl.num_programs(2) - 1)
    def _():
        o_ref[...] = acc_ref[...].astype(o_ref.dtype)


# ---------------------------------------------------------------------------
# Weight preparation (hoist out of the per-call path)
# ---------------------------------------------------------------------------
def prepare_weights(weights, bias_term=None, *, compute_dtype=jnp.bfloat16):
    """Transpose PyTorch (out, in) weights to (K, N), pad to 128 lanes and cast
    to the MXU compute dtype.  Do this once per weight; bias stays f32 (it is
    added to the f32 accumulator)."""
    N, K = weights.shape
    Kp = _round_up(K, _LANE)
    Np = _round_up(N, _LANE)
    wT = jnp.transpose(weights).astype(compute_dtype)            # (K, N)
    wp = wT if (Kp, Np) == (K, N) else (
        jnp.zeros((Kp, Np), compute_dtype).at[:K, :N].set(wT))
    bp = None
    if bias_term is not None:
        b = bias_term.astype(jnp.float32).reshape(1, N)
        bp = b if Np == N else jnp.zeros((1, Np), jnp.float32).at[:, :N].set(b)
    return wp, bp, N


# ---------------------------------------------------------------------------
# Forward
# ---------------------------------------------------------------------------
def _linear_prepared(x, wp, bp, out_features, *, compute_dtype, out_dtype=None):
    """y = x @ wp (+ bias); wp is the pre-transposed, padded (Kp, Np) weight."""
    out_dtype = x.dtype if out_dtype is None else out_dtype
    *lead, K = x.shape
    Kp, Np = wp.shape
    N = out_features

    M = 1
    for d in lead:
        M *= d
    x2 = x.reshape(M, K).astype(compute_dtype)

    isize = jnp.dtype(compute_dtype).itemsize
    osize = jnp.dtype(out_dtype).itemsize
    sub = 16 if isize < 4 else 8           # min sublane tile (bf16 packs 2/row)

    tk = _pick_tile(Kp, 512)
    tn = _pick_tile(Np, 512)
    w_single = (tk == Kp and tn == Np)     # whole weight resident in one tile

    # VMEM-budget-aware row tile:
    #   2*tm*tk (x, double-buffered) + w_bufs*tk*tn (weight)
    #   + 2*tm*tn (out, double-buffered) + tm*tn*4 (f32 accumulator) + bias
    w_bufs = 1 if w_single else 2
    fixed = w_bufs * tk * tn * isize + 2 * tn * 4
    per_row = 2 * tk * isize + 2 * tn * osize + tn * 4
    tm = max(sub, ((_VMEM_BUDGET - fixed) // per_row) // sub * sub)
    # Keep >= ~4 M-steps so the pipeline double-buffers and both v7x cores work.
    tm = min(tm, _MAX_TM, _round_up(max(_cdiv(M, 4), sub), sub))
    Mp = _round_up(M, tm)

    xp = x2 if (Mp == M and Kp == K) else (
        jnp.zeros((Mp, Kp), compute_dtype).at[:M, :K].set(x2))

    grid = (Mp // tm, Np // tn, Kp // tk)
    x_spec = pl.BlockSpec((tm, tk), lambda i, j, k: (i, k))
    w_spec = _block_spec((tk, tn), lambda i, j, k: (k, j),
                         single_buffered=w_single)
    o_spec = pl.BlockSpec((tm, tn), lambda i, j, k: (i, j))

    cost = pl.CostEstimate(
        flops=2 * Mp * Np * Kp,
        transcendentals=0,
        bytes_accessed=isize * (Mp * Kp + Kp * Np) + osize * Mp * Np,
    )
    cparams = pltpu.CompilerParams(
        dimension_semantics=("parallel", "parallel", "arbitrary"),
        vmem_limit_bytes=_VMEM_LIMIT,
    )
    scratch = [pltpu.VMEM((tm, tn), jnp.float32)]

    if bp is not None:
        b_spec = _block_spec((1, tn), lambda i, j, k: (0, j),
                             single_buffered=(tn == Np))
        out = pl.pallas_call(
            _linear_bias_kernel,
            out_shape=jax.ShapeDtypeStruct((Mp, Np), out_dtype),
            grid=grid,
            in_specs=[x_spec, w_spec, b_spec],
            out_specs=o_spec,
            scratch_shapes=scratch,
            compiler_params=cparams,
            cost_estimate=cost,
        )(xp, wp, bp)
    else:
        out = pl.pallas_call(
            _linear_nobias_kernel,
            out_shape=jax.ShapeDtypeStruct((Mp, Np), out_dtype),
            grid=grid,
            in_specs=[x_spec, w_spec],
            out_specs=o_spec,
            scratch_shapes=scratch,
            compiler_params=cparams,
            cost_estimate=cost,
        )(xp, wp)

    return out[:M, :N].reshape(*lead, N)


def linear_regression_forward(x, weights, bias_term=None, *,
                              compute_dtype=jnp.bfloat16):
    """Functional forward: y = x @ weights.T (+ bias_term).

    weights: (out_features, in_features), PyTorch layout.
    """
    # TODO(synk): the PyTorch forward's `print('forward')` debug side-effect is
    # not reproduced (pure debug print, no numerical effect).
    assert x.shape[-1] == weights.shape[1], (x.shape, weights.shape)
    wp, bp, N = prepare_weights(weights, bias_term, compute_dtype=compute_dtype)
    return _linear_prepared(x, wp, bp, N, compute_dtype=compute_dtype)


class LinearRegression:
    """Pallas-backed forward of the PyTorch LinearRegression module.
    Weight transpose/pad/cast is done once at construction, so the per-call
    path only touches x and the fused matmul+bias kernel."""

    def __init__(self, weights, bias_term=None, *, compute_dtype=jnp.bfloat16):
        self.out_features, self.in_features = weights.shape
        self.compute_dtype = compute_dtype
        self._wp, self._bp, _ = prepare_weights(
            weights, bias_term, compute_dtype=compute_dtype)

    def __call__(self, x):
        assert x.shape[-1] == self.in_features
        return _linear_prepared(x, self._wp, self._bp, self.out_features,
                                compute_dtype=self.compute_dtype)


# ---------------------------------------------------------------------------
# Smoke test
# ---------------------------------------------------------------------------
if __name__ == "__main__":
    key = jax.random.PRNGKey(0)
    k_x, k_w, k_b = jax.random.split(key, 3)

    batch, in_features, out_features = 16, 32, 8
    x = jax.random.normal(k_x, (batch, in_features), jnp.float32)
    weights = jax.random.normal(k_w, (out_features, in_features), jnp.float32)
    bias_term = jax.random.normal(k_b, (out_features,), jnp.float32)

    ref = x @ weights.T + bias_term
    ref_nb = x @ weights.T

    # Default path: bf16 MXU operands, f32 accumulate (loose tolerance vs f32 ref).
    fwd = jax.jit(linear_regression_forward)
    out = jax.block_until_ready(fwd(x, weights, bias_term))
    assert out.shape == (batch, out_features), out.shape
    assert out.dtype == jnp.float32
    assert bool(jnp.all(jnp.isfinite(out)))
    assert bool(jnp.allclose(out, ref, atol=2.5e-1, rtol=5e-2))

    # Exact-f32 path: tight tolerance.
    fwd32 = jax.jit(functools.partial(linear_regression_forward,
                                      compute_dtype=jnp.float32))
    out32 = jax.block_until_ready(fwd32(x, weights, bias_term))
    assert bool(jnp.allclose(out32, ref, atol=1e-4, rtol=1e-4))

    # bias=False path.
    fwd_nb = jax.jit(lambda a, w: linear_regression_forward(a, w, None))
    out_nb = jax.block_until_ready(fwd_nb(x, weights))
    assert bool(jnp.allclose(out_nb, ref_nb, atol=2.5e-1, rtol=5e-2))

    # Module path with pre-prepared (hoisted) weights.
    model = LinearRegression(weights, bias_term)
    out_m = jax.block_until_ready(jax.jit(model.__call__)(x))
    assert bool(jnp.allclose(out_m, ref, atol=2.5e-1, rtol=5e-2))

    print("KERNEL_OK")
</pallas_src>

<mosaic_0001>
module attributes {stable_mosaic.version = 11 : i64} {
  func.func @_linear_bias_kernel(%arg0: i32, %arg1: i32, %arg2: i32, %arg3: memref<16x128xbf16, #tpu.memory_space<vmem>>, %arg4: memref<128x128xbf16, #tpu.memory_space<vmem>>, %arg5: memref<1x128xf32, #tpu.memory_space<vmem>>, %arg6: memref<16x128xf32, #tpu.memory_space<vmem>>, %arg7: memref<16x128xf32, #tpu.memory_space<vmem>>) attributes {dimension_semantics = [#tpu.dimension_semantics<parallel>, #tpu.dimension_semantics<parallel>, #tpu.dimension_semantics<arbitrary>], iteration_bounds = array<i64: 1, 1, 1>, scalar_prefetch = 0 : i64, scratch_operands = 1 : i64, tpu.core_type = #tpu.core_type<tc>, window_params = [{transform_indices = @transform_0, window_bounds = array<i64: 16, 128>}, {pipeline_mode = #tpu.pipeline_mode<synchronous>, transform_indices = @transform_1, window_bounds = array<i64: 128, 128>}, {pipeline_mode = #tpu.pipeline_mode<synchronous>, transform_indices = @transform_2, window_bounds = array<i64: 1, 128>}, {transform_indices = @transform_3, window_bounds = array<i64: 16, 128>}]} {
    %c0_i32 = arith.constant 0 : i32
    %0 = arith.cmpi eq, %arg2, %c0_i32 : i32
    %1 = arith.extui %0 : i1 to i32
    %c0_i32_0 = arith.constant 0 : i32
    %2 = arith.cmpi ne, %1, %c0_i32_0 : i32
    scf.if %2 {
      %cst_10 = arith.constant 0.000000e+00 : f32
      %12 = vector.broadcast %cst_10 : f32 to vector<16x128xf32>
      %c0_11 = arith.constant 0 : index
      %c0_12 = arith.constant 0 : index
      %13 = vector.load %arg7[%c0_11, %c0_12] : memref<16x128xf32, #tpu.memory_space<vmem>>, vector<16x128xf32>
      tpu.vector_store %arg7[%c0_11, %c0_12], %12 {strides = array<i32>} : memref<16x128xf32, #tpu.memory_space<vmem>>, vector<16x128xf32>,
    } else {
    }
    %c0 = arith.constant 0 : index
    %c0_1 = arith.constant 0 : index
    %3 = vector.load %arg7[%c0, %c0_1] : memref<16x128xf32, #tpu.memory_space<vmem>>, vector<16x128xf32>
    %c0_2 = arith.constant 0 : index
    %c0_3 = arith.constant 0 : index
    %4 = vector.load %arg3[%c0_2, %c0_3] : memref<16x128xbf16, #tpu.memory_space<vmem>>, vector<16x128xbf16>
    %c0_4 = arith.constant 0 : index
    %c0_5 = arith.constant 0 : index
    %5 = vector.load %arg4[%c0_4, %c0_5] : memref<128x128xbf16, #tpu.memory_space<vmem>>, vector<128x128xbf16>
    %cst = arith.constant dense<0.000000e+00> : vector<16x128xf32>
    %6 = tpu.matmul %4, %5, %cst {dimension_numbers = #tpu.dot_dimension_numbers<[1], [0], [0], [1], [0, 0, 1, 1], [], []>} : vector<16x128xbf16>, vector<128x128xbf16>, vector<16x128xf32> -> vector<16x128xf32>
    %7 = arith.addf %3, %6 : vector<16x128xf32>
    %c0_6 = arith.constant 0 : index
    %c0_7 = arith.constant 0 : index
    %8 = vector.load %arg7[%c0_6, %c0_7] : memref<16x128xf32, #tpu.memory_space<vmem>>, vector<16x128xf32>
    tpu.vector_store %arg7[%c0_6, %c0_7], %7 {strides = array<i32>} : memref<16x128xf32, #tpu.memory_space<vmem>>, vector<16x128xf32>,
    %c0_i32_8 = arith.constant 0 : i32
    %9 = arith.cmpi eq, %arg2, %c0_i32_8 : i32
    %10 = arith.extui %9 : i1 to i32
    %c0_i32_9 = arith.constant 0 : i32
    %11 = arith.cmpi ne, %10, %c0_i32_9 : i32
    scf.if %11 {
      %c0_10 = arith.constant 0 : index
      %c0_11 = arith.constant 0 : index
      %12 = vector.load %arg7[%c0_10, %c0_11] : memref<16x128xf32, #tpu.memory_space<vmem>>, vector<16x128xf32>
      %c0_12 = arith.constant 0 : index
      %c0_13 = arith.constant 0 : index
      %13 = vector.load %arg5[%c0_12, %c0_13] : memref<1x128xf32, #tpu.memory_space<vmem>>, vector<1x128xf32>
      %14 = vector.broadcast %13 : vector<1x128xf32> to vector<16x128xf32>
      %15 = arith.addf %12, %14 : vector<16x128xf32>
      %c0_14 = arith.constant 0 : index
      %c0_15 = arith.constant 0 : index
      %16 = vector.load %arg6[%c0_14, %c0_15] : memref<16x128xf32, #tpu.memory_space<vmem>>, vector<16x128xf32>
      tpu.vector_store %arg6[%c0_14, %c0_15], %15 {strides = array<i32>} : memref<16x128xf32, #tpu.memory_space<vmem>>, vector<16x128xf32>,
    } else {
    }
    return
  }
  func.func @transform_0(%arg0: i32, %arg1: i32, %arg2: i32) -> (i32, i32) {
    %c0_i32 = arith.constant 0 : i32
    return %arg0, %arg2 : i32, i32
  }
  func.func @transform_1(%arg0: i32, %arg1: i32, %arg2: i32) -> (i32, i32) {
    %c0_i32 = arith.constant 0 : i32
    return %arg2, %arg1 : i32, i32
  }
  func.func @transform_2(%arg0: i32, %arg1: i32, %arg2: i32) -> (i32, i32) {
    %c0_i32 = arith.constant 0 : i32
    %c0_i32_0 = arith.constant 0 : i32
    return %c0_i32, %arg1 : i32, i32
  }
  func.func @transform_3(%arg0: i32, %arg1: i32, %arg2: i32) -> (i32, i32) {
    %c0_i32 = arith.constant 0 : i32
    return %arg0, %arg1 : i32, i32
  }
}

</mosaic_0001>

<llo_original>
// kernel: linear_regression_forward.1
$region0: #{linear_regression_forward.1}
  #allocation0 [shape = 'u32[]', space=smem, size = 0x4, offset = 0x4, fixed_abs, tag = 'smem constant byte address 0x4 - core index']
  #allocation1 [shape = 'u32[144,128]{1,0:T(1,128)}', space=vmem, size = 0x12000, scoped, tag = 'internal scratch']
  #allocation2 [shape = 'f32[16,128]{1,0:T(8,128)}', space=vmem, size = 0x2000, scoped, tag = 'scratch operand']
  %s0 = inlined_call_operand.vmem [shape: bf16[16,128], index: 0, kind: input, shape index: {}]
  %s1 = inlined_call_operand.vmem [shape: bf16[128,128], index: 1, kind: input, shape index: {}]
  %s2 = inlined_call_operand.vmem [shape: f32[1,128], index: 2, kind: input, shape index: {}]
  %s3 = inlined_call_operand.vmem [shape: f32[16,128], index: 3, kind: output, shape index: {}]
  %s4 = sld [smem:[#allocation0]]
  $region30: #{linear_regression_forward.1} parent=0
    _
  %s6 = ssub.s32 1, %s4
  %s7 = scalar_select 0, %s6, %s4
  // Predicated region
  $region2: #{linear_regression_forward.1} parent=0 // pred_check
    _
  $region3: #{linear_regression_forward.1} parent=0 // pred_check_branch
    %9 = sbr.rel (0) target = $region5
  $region4: #{linear_regression_forward.1} parent=0 // pred_region
    _
  $region5: #{linear_regression_forward.1} parent=0 // pred_fallthru
    _
  // Predicated region
  $region6: #{linear_regression_forward.1} parent=0 // pred_check
    _
  $region7: #{linear_regression_forward.1} parent=0 // pred_check_branch
    %11 = sbr.rel (0) target = $region9
  $region8: #{linear_regression_forward.1} parent=0 // pred_region
    _
  $region9: #{linear_regression_forward.1} parent=0 // pred_fallthru
    _
  // Predicated region
  $region10: #{linear_regression_forward.1} parent=0 // pred_check
    _
  $region11: #{linear_regression_forward.1} parent=0 // pred_check_branch
    %13 = sbr.rel (0) target = $region13
  $region12: #{linear_regression_forward.1} parent=0 // pred_region
    _
  $region13: #{linear_regression_forward.1} parent=0 // pred_fallthru
    _
  %p15 = scmp.eq.s32.totalorder 0, 0
  // Predicated region
  $region14: #{linear_regression_forward.1} parent=0 // pred_check
    %p16 = pneg %p15
  $region15: #{linear_regression_forward.1} parent=0 // pred_check_branch
    %18 = sbr.rel (%p16) target = $region17
  $region16: #{linear_regression_forward.1} parent=0 // pred_region
    %19 = vst [vmem:[#allocation2] sm:$0xff] 0.0
    %20 = vst [vmem:[#allocation2 + $0x8] sm:$0xff] 0.0
  $region17: #{linear_regression_forward.1} parent=0 // pred_fallthru
    _
  %v21 = vld [vmem:[#allocation2] sm:$0xff]
  %v22 = vld [vmem:[#allocation2 + $0x8] sm:$0xff]
  %v23 = vld [vmem:[%s0] sm:$0xf]
  %v24 = vld [vmem:[%s0 + $0x4] sm:$0xf]
  %v25 = vld [vmem:[%s1] sm:$0xf]
  %v26 = vld [vmem:[%s1 + $0x4] sm:$0xf]
  %v27 = vld [vmem:[%s1 + $0x8] sm:$0xf]
  %v28 = vld [vmem:[%s1 + $0xc] sm:$0xf]
  %v29 = vld [vmem:[%s1 + $0x10] sm:$0xf]
  %v30 = vld [vmem:[%s1 + $0x14] sm:$0xf]
  %v31 = vld [vmem:[%s1 + $0x18] sm:$0xf]
  %v32 = vld [vmem:[%s1 + $0x1c] sm:$0xf]
  %v33 = vld [vmem:[%s1 + $0x20] sm:$0xf]
  %v34 = vld [vmem:[%s1 + $0x24] sm:$0xf]
  %v35 = vld [vmem:[%s1 + $0x28] sm:$0xf]
  %v36 = vld [vmem:[%s1 + $0x2c] sm:$0xf]
  %v37 = vld [vmem:[%s1 + $0x30] sm:$0xf]
  %v38 = vld [vmem:[%s1 + $0x34] sm:$0xf]
  %v39 = vld [vmem:[%s1 + $0x38] sm:$0xf]
  %v40 = vld [vmem:[%s1 + $0x3c] sm:$0xf]
  %v43 = vunpack.c.l.b16 %v23
  %v44 = vunpack.c.l.b16 %v24
  %v45 = vpack.c.b16 %v44, %v43
  %v63 = vunpack.c.l.b16 %v25
  %v64 = vunpack.c.l.b16 %v26
  %v65 = vunpack.c.l.b16 %v27
  %v66 = vunpack.c.l.b16 %v28
  %v67 = vunpack.c.l.b16 %v29
  %v68 = vunpack.c.l.b16 %v30
  %v69 = vunpack.c.l.b16 %v31
  %v70 = vunpack.c.l.b16 %v32
  %v71 = vunpack.c.l.b16 %v33
  %v72 = vunpack.c.l.b16 %v34
  %v73 = vunpack.c.l.b16 %v35
  %v74 = vunpack.c.l.b16 %v36
  %v75 = vunpack.c.l.b16 %v37
  %v76 = vunpack.c.l.b16 %v38
  %v77 = vunpack.c.l.b16 %v39
  %v78 = vunpack.c.l.b16 %v40
  %v79 = vpack.c.b16 %v64, %v63
  %v80 = vpack.c.b16 %v66, %v65
  %v81 = vpack.c.b16 %v68, %v67
  %v82 = vpack.c.b16 %v70, %v69
  %v83 = vpack.c.b16 %v72, %v71
  %v84 = vpack.c.b16 %v74, %v73
  %v85 = vpack.c.b16 %v76, %v75
  %v86 = vpack.c.b16 %v78, %v77
  %95 = vmatprep.subr.bf16.mxu0 0
  %96 = vmatpush1.bf16.msra.mxu0 %v86
  %97 = vmatprep.subr.bf16.mxu0 0
  %98 = vmatpush1.bf16.msra.mxu0 %v85
  %99 = vmatprep.subr.bf16.mxu0 0
  %100 = vmatpush1.bf16.msra.mxu0 %v84
  %101 = vmatprep.subr.bf16.mxu0 0
  %102 = vmatpush1.bf16.msra.mxu0 %v83
  %103 = vmatprep.subr.bf16.mxu0 0
  %104 = vmatpush1.bf16.msra.mxu0 %v82
  %105 = vmatprep.subr.bf16.mxu0 0
  %106 = vmatpush1.bf16.msra.mxu0 %v81
  %107 = vmatprep.subr.bf16.mxu0 0
  %108 = vmatpush1.bf16.msra.mxu0 %v80
  %109 = vmatprep.subr.bf16.mxu0 0
  %110 = vmatpush1.bf16.msra.mxu0 %v79
  %111 = vmatprep.subr.bf16.mxu0 0
  %112 = vmatpush2.bf16.msra.mxu0 0
  %113 = vmatprep.subr.bf16.mxu0 0
  %114 = vmatpush2.bf16.msra.mxu0 0
  %115 = vmatprep.subr.bf16.mxu0 0
  %116 = vmatpush2.bf16.msra.mxu0 0
  %117 = vmatprep.subr.bf16.mxu0 0
  %118 = vmatpush2.bf16.msra.mxu0 0
  %119 = vmatprep.subr.bf16.mxu0 0
  %120 = vmatpush2.bf16.msra.mxu0 0
  %121 = vmatprep.subr.bf16.mxu0 0
  %122 = vmatpush2.bf16.msra.mxu0 0
  %123 = vmatprep.subr.bf16.mxu0 0
  %124 = vmatpush2.bf16.msra.mxu0 0
  %125 = vmatprep.subr.bf16.mxu0 0
  %126 = vmatpush2.bf16.msra.mxu0 0
  %127 = vmatprep.mubr.bf16.mxu0 0
  %128 = vmatmul.mubr.bf16.gmra.mxu0 %v45
  %v129 = vpop.f32.mrf.mxu0
  %v130 = vadd.f32 0.0, %v129
  %v131 = vpop.f32.mrf.mxu0
  %v132 = vpop.f32.mrf.mxu0
  %v133 = vadd.f32 0.0, %v132
  %v134 = vpop.f32.mrf.mxu0
  %135 = vdwg.mxu0
  %v136 = vadd.f32 %v21, %v130
  %v137 = vadd.f32 %v22, %v133
  %138 = vst [vmem:[#allocation2] sm:$0xff] %v136
  %139 = vst [vmem:[#allocation2 + $0x8] sm:$0xff] %v137
  // Predicated region
  $region18: #{linear_regression_forward.1} parent=0 // pred_check
    %p140 = pneg %p15
  $region19: #{linear_regression_forward.1} parent=0 // pred_check_branch
    %142 = sbr.rel (%p140) target = $region21
  $region20: #{linear_regression_forward.1} parent=0 // pred_region
    %v143 = vld [vmem:[#allocation2] sm:$0xff]
    %v144 = vld [vmem:[#allocation2 + $0x8] sm:$0xff]
    %v145 = vld [vmem:[%s2] sm:$0x1]
    %v147 = vlaneseq
    %v148 = vshrl.u32 %v147, 7
    %v149 = vsub.s32 0, %v148
    %v150 = vrot.slane %v145, %v149
    %v152 = vadd.f32 %v143, %v150
    %v153 = vadd.f32 %v144, %v150
    %154 = vst [vmem:[%s3] sm:$0xff] %v152
    %155 = vst [vmem:[%s3 + $0x8] sm:$0xff] %v153
  $region21: #{linear_regression_forward.1} parent=0 // pred_fallthru
    _
  // Predicated region
  $region22: #{linear_regression_forward.1} parent=0 // pred_check
    _
  $region23: #{linear_regression_forward.1} parent=0 // pred_check_branch
    %157 = sbr.rel (0) target = $region25
  $region24: #{linear_regression_forward.1} parent=0 // pred_region
    _
  $region25: #{linear_regression_forward.1} parent=0 // pred_fallthru
    _
  // Predicated region
  $region26: #{linear_regression_forward.1} parent=0 // pred_check
    _
  $region27: #{linear_regression_forward.1} parent=0 // pred_check_branch
    %159 = sbr.rel (0) target = $region29
  $region28: #{linear_regression_forward.1} parent=0 // pred_region
    _
  $region29: #{linear_regression_forward.1} parent=0 // pred_fallthru
    _

</llo_original>
